<compile_context>
chip_gen: v7x
topology: tpu7x:2x2x1
jax: 0.10.0
libtpu: 0.0.40
codegen_flags: <defaults>
</compile_context>

<pallas_src>
import jax
import jax.numpy as jnp
from jax.experimental import pallas as pl
from jax.experimental.pallas import tpu as pltpu

_LANES = 128
_SUBLANES = 8


def _gscore_kernel(y_ref, z_ref, d_ref, acc_ref):
    # y_ref  : (1, tile_r, 128)      labels (values in {0, 1})
    # z_ref  : (1, 2, tile_r, 128)   logits, channel 0 = neg, channel 1 = pos
    # d_ref  : (1, tile_r, 128)      weights
    # acc_ref: (1, 3, 8, 128)        per-batch partial sums [good, fa, miss]
    r = pl.program_id(1)

    y = y_ref[0]
    z0 = z_ref[0, 0].astype(jnp.float32)
    z1 = z_ref[0, 1].astype(jnp.float32)
    d = d_ref[0].astype(jnp.float32)

    zs = z1 - z0
    zp = jnp.maximum(zs, 0.0)
    zm = jnp.maximum(-zs, 0.0)

    is_one = (y == 1)
    is_zero = (y == 0)   # keep exact (y == 0) semantics of the reference

    good = jnp.where(is_one, zp, 0.0)
    good = jnp.minimum(good, 0.9 + 0.1 * good)
    fa = jnp.where(is_zero, zp * d, 0.0)
    miss = jnp.where(is_one, zm, 0.0)

    def fold(x):  # (tile_r, 128) -> (8, 128); leading-axis sum = VPU adds only
        return jnp.sum(x.reshape(-1, _SUBLANES, _LANES), axis=0)

    @pl.when(r == 0)
    def _init():
        acc_ref[...] = jnp.zeros_like(acc_ref)

    acc_ref[0, 0] += fold(good)
    acc_ref[0, 1] += fold(fa)
    acc_ref[0, 2] += fold(miss)


def _pick_tile_rows(rows, cap):
    """Largest multiple-of-8 divisor of `rows` that is <= cap (rows % 8 == 0)."""
    best = _SUBLANES
    t = _SUBLANES
    limit = min(rows, cap)
    while t <= limit:
        if rows % t == 0:
            best = t
        t += _SUBLANES
    return best


def gscore_loss(y, z, D, *, max_tile_rows=2048):
    """Pallas implementation of GscoreLoss.forward(y, z, D)."""
    B, C, H, W = z.shape
    assert C == 2
    assert y.shape == (B, H, W) and D.shape == (B, H, W)

    hw = H * W
    unit = _SUBLANES * _LANES  # 1024
    hw_pad = ((hw + unit - 1) // unit) * unit
    rows = hw_pad // _LANES    # multiple of 8

    # Layout-preserving flatten of each (H, W) plane; z keeps both channels
    # together so the kernel reads it in place (no per-channel HBM copy).
    y2 = y.reshape(B, hw)
    d2 = D.reshape(B, hw)
    z3 = z.reshape(B, 2, hw)
    if hw_pad != hw:
        # Zero padding contributes 0 to good/fa/miss (zs = 0, masked terms = 0).
        pad = hw_pad - hw
        y2 = jnp.pad(y2, ((0, 0), (0, pad)))
        d2 = jnp.pad(d2, ((0, 0), (0, pad)))
        z3 = jnp.pad(z3, ((0, 0), (0, 0), (0, pad)))
    y3 = y2.reshape(B, rows, _LANES)
    d3 = d2.reshape(B, rows, _LANES)
    z4 = z3.reshape(B, 2, rows, _LANES)

    tile_r = _pick_tile_rows(rows, max_tile_rows)
    grid = (B, rows // tile_r)

    plane_spec = pl.BlockSpec((1, tile_r, _LANES), lambda b, r: (b, r, 0))
    z_spec = pl.BlockSpec((1, 2, tile_r, _LANES), lambda b, r: (b, 0, r, 0))
    acc_spec = pl.BlockSpec((1, 3, _SUBLANES, _LANES), lambda b, r: (b, 0, 0, 0))

    partials = pl.pallas_call(
        _gscore_kernel,
        out_shape=jax.ShapeDtypeStruct((B, 3, _SUBLANES, _LANES), jnp.float32),
        grid_spec=pltpu.PrefetchScalarGridSpec(
            num_scalar_prefetch=0,
            grid=grid,
            in_specs=[plane_spec, z_spec, plane_spec],
            out_specs=acc_spec,
        ),
        compiler_params=pltpu.CompilerParams(
            dimension_semantics=("parallel", "arbitrary"),
            vmem_limit_bytes=32 * 1024 * 1024,
        ),
    )(y3, z4, d3)

    # Single cross-lane/batch combine + precision/recall scalar math (cheap).
    sums = jnp.sum(partials, axis=(0, 2, 3))  # (3,) = [good, fa, miss]
    good, fa, miss = sums[0], sums[1], sums[2]
    precision = good / (good + fa + 0.0001)
    recall = good / (good + miss + 0.0001)
    return 1.0 - precision * recall


def gscore_loss_ref(y, z, D):
    """Pure-JAX reference mirroring the PyTorch module."""
    zs = z[:, 1, :, :] - z[:, 0, :, :]
    zp = jnp.maximum(zs, 0.0)
    zm = jnp.maximum(-zs, 0.0)
    good = zp * (y == 1).astype(jnp.float32)
    good = jnp.minimum(good, 0.9 + 0.1 * good)
    good = jnp.sum(good)
    fa = jnp.sum(zp * D * (y == 0).astype(jnp.float32))
    miss = jnp.sum(zm * (y == 1).astype(jnp.float32))
    precision = good / (good + fa + 0.0001)
    recall = good / (good + miss + 0.0001)
    return 1.0 - precision * recall


if __name__ == "__main__":
    B, H, W = 2, 16, 16
    key = jax.random.PRNGKey(0)
    ky, kz, kd = jax.random.split(key, 3)

    y = jax.random.bernoulli(ky, p=0.5, shape=(B, H, W)).astype(jnp.float32)
    z = jax.random.normal(kz, (B, 2, H, W), dtype=jnp.float32)
    D = jax.random.uniform(kd, (B, H, W), dtype=jnp.float32)

    out = jax.block_until_ready(gscore_loss(y, z, D))
    ref = gscore_loss_ref(y, z, D)
    assert jnp.allclose(out, ref, atol=1e-5, rtol=1e-5), (out, ref)

    print("KERNEL_OK")
</pallas_src>

<mosaic_0001>
module attributes {stable_mosaic.version = 11 : i64} {
  func.func @_gscore_kernel(%arg0: i32, %arg1: i32, %arg2: memref<1x8x128xf32, #tpu.memory_space<vmem>>, %arg3: memref<1x2x8x128xf32, #tpu.memory_space<vmem>>, %arg4: memref<1x8x128xf32, #tpu.memory_space<vmem>>, %arg5: memref<1x3x8x128xf32, #tpu.memory_space<vmem>>) attributes {dimension_semantics = [#tpu.dimension_semantics<parallel>, #tpu.dimension_semantics<arbitrary>], iteration_bounds = array<i64: 2, 1>, scalar_prefetch = 0 : i64, scratch_operands = 0 : i64, tpu.core_type = #tpu.core_type<tc>, window_params = [{transform_indices = @transform_0, window_bounds = array<i64: 1, 8, 128>}, {transform_indices = @transform_1, window_bounds = array<i64: 1, 2, 8, 128>}, {transform_indices = @transform_2, window_bounds = array<i64: 1, 8, 128>}, {transform_indices = @transform_3, window_bounds = array<i64: 1, 3, 8, 128>}]} {
    %c0 = arith.constant 0 : index
    %c0_0 = arith.constant 0 : index
    %c0_1 = arith.constant 0 : index
    %0 = vector.load %arg2[%c0, %c0_0, %c0_1] : memref<1x8x128xf32, #tpu.memory_space<vmem>>, vector<1x8x128xf32>
    %1 = vector.shape_cast %0 : vector<1x8x128xf32> to vector<8x128xf32>
    %c0_2 = arith.constant 0 : index
    %c0_3 = arith.constant 0 : index
    %c0_4 = arith.constant 0 : index
    %c0_5 = arith.constant 0 : index
    %2 = vector.load %arg3[%c0_2, %c0_3, %c0_4, %c0_5] : memref<1x2x8x128xf32, #tpu.memory_space<vmem>>, vector<1x1x8x128xf32>
    %3 = vector.shape_cast %2 : vector<1x1x8x128xf32> to vector<8x128xf32>
    %c0_6 = arith.constant 0 : index
    %c1 = arith.constant 1 : index
    %c0_7 = arith.constant 0 : index
    %c0_8 = arith.constant 0 : index
    %4 = vector.load %arg3[%c0_6, %c1, %c0_7, %c0_8] : memref<1x2x8x128xf32, #tpu.memory_space<vmem>>, vector<1x1x8x128xf32>
    %5 = vector.shape_cast %4 : vector<1x1x8x128xf32> to vector<8x128xf32>
    %c0_9 = arith.constant 0 : index
    %c0_10 = arith.constant 0 : index
    %c0_11 = arith.constant 0 : index
    %6 = vector.load %arg4[%c0_9, %c0_10, %c0_11] : memref<1x8x128xf32, #tpu.memory_space<vmem>>, vector<1x8x128xf32>
    %7 = vector.shape_cast %6 : vector<1x8x128xf32> to vector<8x128xf32>
    %8 = arith.subf %5, %3 : vector<8x128xf32>
    %cst = arith.constant 0.000000e+00 : f32
    %9 = vector.broadcast %cst : f32 to vector<8x128xf32>
    %10 = arith.maximumf %8, %9 : vector<8x128xf32>
    %cst_12 = arith.constant 0.000000e+00 : f32
    %11 = vector.broadcast %cst_12 : f32 to vector<8x128xf32>
    %12 = arith.subf %11, %8 : vector<8x128xf32>
    %cst_13 = arith.constant 0.000000e+00 : f32
    %13 = vector.broadcast %cst_13 : f32 to vector<8x128xf32>
    %14 = arith.maximumf %12, %13 : vector<8x128xf32>
    %cst_14 = arith.constant 1.000000e+00 : f32
    %15 = vector.broadcast %cst_14 : f32 to vector<8x128xf32>
    %16 = arith.cmpf oeq, %1, %15 : vector<8x128xf32>
    %cst_15 = arith.constant 0.000000e+00 : f32
    %17 = vector.broadcast %cst_15 : f32 to vector<8x128xf32>
    %18 = arith.cmpf oeq, %1, %17 : vector<8x128xf32>
    %cst_16 = arith.constant 0.000000e+00 : f32
    %19 = vector.broadcast %cst_16 : f32 to vector<8x128xf32>
    %20 = arith.select %16, %10, %19 : vector<8x128xi1>, vector<8x128xf32>
    %cst_17 = arith.constant 1.000000e-01 : f32
    %21 = vector.broadcast %cst_17 : f32 to vector<8x128xf32>
    %22 = arith.mulf %21, %20 : vector<8x128xf32>
    %cst_18 = arith.constant 0.899999976 : f32
    %23 = vector.broadcast %cst_18 : f32 to vector<8x128xf32>
    %24 = arith.addf %23, %22 : vector<8x128xf32>
    %25 = arith.minimumf %20, %24 : vector<8x128xf32>
    %26 = arith.mulf %10, %7 : vector<8x128xf32>
    %cst_19 = arith.constant 0.000000e+00 : f32
    %27 = vector.broadcast %cst_19 : f32 to vector<8x128xf32>
    %28 = arith.select %18, %26, %27 : vector<8x128xi1>, vector<8x128xf32>
    %cst_20 = arith.constant 0.000000e+00 : f32
    %29 = vector.broadcast %cst_20 : f32 to vector<8x128xf32>
    %30 = arith.select %16, %14, %29 : vector<8x128xi1>, vector<8x128xf32>
    %c0_i32 = arith.constant 0 : i32
    %31 = arith.cmpi eq, %arg1, %c0_i32 : i32
    %32 = arith.extui %31 : i1 to i32
    %c0_i32_21 = arith.constant 0 : i32
    %33 = arith.cmpi ne, %32, %c0_i32_21 : i32
    scf.if %33 {
      %cst_48 = arith.constant 0.000000e+00 : f32
      %58 = vector.broadcast %cst_48 : f32 to vector<1x3x8x128xf32>
      %c0_49 = arith.constant 0 : index
      %c0_50 = arith.constant 0 : index
      %c0_51 = arith.constant 0 : index
      %c0_52 = arith.constant 0 : index
      %59 = vector.load %arg5[%c0_49, %c0_50, %c0_51, %c0_52] : memref<1x3x8x128xf32, #tpu.memory_space<vmem>>, vector<1x3x8x128xf32>
      tpu.vector_store %arg5[%c0_49, %c0_50, %c0_51, %c0_52], %58 {strides = array<i32>} : memref<1x3x8x128xf32, #tpu.memory_space<vmem>>, vector<1x3x8x128xf32>,
    } else {
    }
    %c0_22 = arith.constant 0 : index
    %c0_23 = arith.constant 0 : index
    %c0_24 = arith.constant 0 : index
    %c0_25 = arith.constant 0 : index
    %34 = vector.load %arg5[%c0_22, %c0_23, %c0_24, %c0_25] : memref<1x3x8x128xf32, #tpu.memory_space<vmem>>, vector<1x1x8x128xf32>
    %35 = vector.shape_cast %34 : vector<1x1x8x128xf32> to vector<8x128xf32>
    %36 = vector.shape_cast %25 : vector<8x128xf32> to vector<1x8x128xf32>
    %cst_26 = arith.constant dense<0.000000e+00> : vector<8x128xf32>
    %37 = vector.multi_reduction <add>, %36, %cst_26 [0] : vector<1x8x128xf32> to vector<8x128xf32>
    %38 = arith.addf %35, %37 : vector<8x128xf32>
    %c0_27 = arith.constant 0 : index
    %c0_28 = arith.constant 0 : index
    %c0_29 = arith.constant 0 : index
    %c0_30 = arith.constant 0 : index
    %39 = vector.load %arg5[%c0_27, %c0_28, %c0_29, %c0_30] : memref<1x3x8x128xf32, #tpu.memory_space<vmem>>, vector<1x1x8x128xf32>
    %40 = vector.shape_cast %39 : vector<1x1x8x128xf32> to vector<8x128xf32>
    %41 = vector.shape_cast %38 : vector<8x128xf32> to vector<1x1x8x128xf32>
    tpu.vector_store %arg5[%c0_27, %c0_28, %c0_29, %c0_30], %41 {strides = array<i32>} : memref<1x3x8x128xf32, #tpu.memory_space<vmem>>, vector<1x1x8x128xf32>,
    %c0_31 = arith.constant 0 : index
    %c1_32 = arith.constant 1 : index
    %c0_33 = arith.constant 0 : index
    %c0_34 = arith.constant 0 : index
    %42 = vector.load %arg5[%c0_31, %c1_32, %c0_33, %c0_34] : memref<1x3x8x128xf32, #tpu.memory_space<vmem>>, vector<1x1x8x128xf32>
    %43 = vector.shape_cast %42 : vector<1x1x8x128xf32> to vector<8x128xf32>
    %44 = vector.shape_cast %28 : vector<8x128xf32> to vector<1x8x128xf32>
    %cst_35 = arith.constant dense<0.000000e+00> : vector<8x128xf32>
    %45 = vector.multi_reduction <add>, %44, %cst_35 [0] : vector<1x8x128xf32> to vector<8x128xf32>
    %46 = arith.addf %43, %45 : vector<8x128xf32>
    %c0_36 = arith.constant 0 : index
    %c1_37 = arith.constant 1 : index
    %c0_38 = arith.constant 0 : index
    %c0_39 = arith.constant 0 : index
    %47 = vector.load %arg5[%c0_36, %c1_37, %c0_38, %c0_39] : memref<1x3x8x128xf32, #tpu.memory_space<vmem>>, vector<1x1x8x128xf32>
    %48 = vector.shape_cast %47 : vector<1x1x8x128xf32> to vector<8x128xf32>
    %49 = vector.shape_cast %46 : vector<8x128xf32> to vector<1x1x8x128xf32>
    tpu.vector_store %arg5[%c0_36, %c1_37, %c0_38, %c0_39], %49 {strides = array<i32>} : memref<1x3x8x128xf32, #tpu.memory_space<vmem>>, vector<1x1x8x128xf32>,
    %c0_40 = arith.constant 0 : index
    %c2 = arith.constant 2 : index
    %c0_41 = arith.constant 0 : index
    %c0_42 = arith.constant 0 : index
    %50 = vector.load %arg5[%c0_40, %c2, %c0_41, %c0_42] : memref<1x3x8x128xf32, #tpu.memory_space<vmem>>, vector<1x1x8x128xf32>
    %51 = vector.shape_cast %50 : vector<1x1x8x128xf32> to vector<8x128xf32>
    %52 = vector.shape_cast %30 : vector<8x128xf32> to vector<1x8x128xf32>
    %cst_43 = arith.constant dense<0.000000e+00> : vector<8x128xf32>
    %53 = vector.multi_reduction <add>, %52, %cst_43 [0] : vector<1x8x128xf32> to vector<8x128xf32>
    %54 = arith.addf %51, %53 : vector<8x128xf32>
    %c0_44 = arith.constant 0 : index
    %c2_45 = arith.constant 2 : index
    %c0_46 = arith.constant 0 : index
    %c0_47 = arith.constant 0 : index
    %55 = vector.load %arg5[%c0_44, %c2_45, %c0_46, %c0_47] : memref<1x3x8x128xf32, #tpu.memory_space<vmem>>, vector<1x1x8x128xf32>
    %56 = vector.shape_cast %55 : vector<1x1x8x128xf32> to vector<8x128xf32>
    %57 = vector.shape_cast %54 : vector<8x128xf32> to vector<1x1x8x128xf32>
    tpu.vector_store %arg5[%c0_44, %c2_45, %c0_46, %c0_47], %57 {strides = array<i32>} : memref<1x3x8x128xf32, #tpu.memory_space<vmem>>, vector<1x1x8x128xf32>,
    return
  }
  func.func @transform_0(%arg0: i32, %arg1: i32) -> (i32, i32, i32) {
    %c0_i32 = arith.constant 0 : i32
    %c0_i32_0 = arith.constant 0 : i32
    return %arg0, %arg1, %c0_i32 : i32, i32, i32
  }
  func.func @transform_1(%arg0: i32, %arg1: i32) -> (i32, i32, i32, i32) {
    %c0_i32 = arith.constant 0 : i32
    %c0_i32_0 = arith.constant 0 : i32
    %c0_i32_1 = arith.constant 0 : i32
    return %arg0, %c0_i32, %arg1, %c0_i32_0 : i32, i32, i32, i32
  }
  func.func @transform_2(%arg0: i32, %arg1: i32) -> (i32, i32, i32) {
    %c0_i32 = arith.constant 0 : i32
    %c0_i32_0 = arith.constant 0 : i32
    return %arg0, %arg1, %c0_i32 : i32, i32, i32
  }
  func.func @transform_3(%arg0: i32, %arg1: i32) -> (i32, i32, i32, i32) {
    %c0_i32 = arith.constant 0 : i32
    %c0_i32_0 = arith.constant 0 : i32
    %c0_i32_1 = arith.constant 0 : i32
    %c0_i32_2 = arith.constant 0 : i32
    return %arg0, %c0_i32, %c0_i32_0, %c0_i32_1 : i32, i32, i32, i32
  }
}

</mosaic_0001>

<llo_original>
// kernel: tpu_custom_call.1
$region0: #{tpu_custom_call.1}
  #allocation0 [shape = 'u32[]', space=smem, size = 0x4, offset = 0x4, fixed_abs, tag = 'smem constant byte address 0x4 - core index']
  #allocation1 [shape = 'u32[144,128]{1,0:T(1,128)}', space=vmem, size = 0x12000, scoped, tag = 'internal scratch']
  %s0 = inlined_call_operand.hbm [shape: f32[2,8,128], index: 0, kind: input, shape index: {}]
  %s1 = inlined_call_operand.hbm [shape: f32[2,2,8,128], index: 1, kind: input, shape index: {}]
  %s2 = inlined_call_operand.hbm [shape: f32[2,8,128], index: 2, kind: input, shape index: {}]
  %s3 = inlined_call_operand.hbm [shape: f32[2,3,8,128], index: 3, kind: output, shape index: {}]
  %s4 = sld [smem:[#allocation0]]
  $region61: #{tpu_custom_call.1} parent=0
    _
  %s6 = ssub.s32 1, %s4
  %s7 = scalar_select 0, %s6, %s4
  $region1: #{tpu_custom_call.1} parent=0
    #allocation2 [shape = 'u8[8192]{0}', space=vmem, size = 0x2000, scoped, tag = 'input window, operand 0']
    #allocation3 [shape = 's32[2]{0}', space=sflag, size = 0x8, scoped, tag = 'scoped memory for tpu_custom_call.1']
    #allocation4 [shape = 's32[2]{0}', space=sflag, size = 0x8, scoped, tag = 'scoped memory for tpu_custom_call.1']
    #allocation5 [shape = 'u8[16384]{0}', space=vmem, size = 0x4000, scoped, tag = 'input window, operand 1']
    #allocation6 [shape = 's32[2]{0}', space=sflag, size = 0x8, scoped, tag = 'scoped memory for tpu_custom_call.1']
    #allocation7 [shape = 'u8[8192]{0}', space=vmem, size = 0x2000, scoped, tag = 'input window, operand 2']
    #allocation8 [shape = 'u8[24576]{0}', space=vmem, size = 0x6000, scoped, tag = 'output window, operand 0']
    %8 = vsyncpa [#allocation3], 0
    %s9 = scalar_lea.sflag [#allocation3], 1
    %10 = vsyncpa %s9, 0
    %11 = vsyncpa [#allocation6], 0
    %s12 = scalar_lea.sflag [#allocation6], 1
    %13 = vsyncpa %s12, 0
    %14 = vsyncpa [#allocation4], 0
    %s15 = scalar_lea.sflag [#allocation4], 1
    %16 = vsyncpa %s15, 0
    loop: start=0, step=1, limit=4
    $region2: #{tpu_custom_call.1} parent=1 // loop_pre_header
      _
    $region3: #{tpu_custom_call.1} parent=1 // loop_header
      %s18 = sphi 0, %s22
      %p19 = scmp.ge.s32.totalorder %s18, 4
      %s25 = sphi 0, %s37
      %s26 = sphi 0, %s33
      %s27 = sphi 0, %s25
      %s28 = sphi 0, %s26
      %s29 = sphi 0, %s27
      %s30 = sphi 0, %s28
      %s42 = sphi 0, %s44
      %s45 = sphi 0, %s42
      %s46 = sphi 0, %s45
      %s62 = sphi 0, %s46
      %s70 = sphi 0, %s72
      %s73 = sphi 0, %s70
      %s74 = sphi 0, %s73
      %s90 = sphi 0, %s74
      %s98 = sphi 0, %s100
      %s101 = sphi 0, %s98
      %s102 = sphi 0, %s101
      %s118 = sphi 0, %s102
      %s124 = sphi 0, %s126
      %s127 = sphi 0, %s124
      %s128 = sphi 0, %s127
      %s144 = sphi 0, %s128
    $region4: #{tpu_custom_call.1} parent=1 // loop_header_branch
      %21 = sbr.rel (%p19) target = $region8
    $region5: #{tpu_custom_call.1} parent=1 // loop_body
      %s23 = ssub.s32 %s18, 1
      %s24 = ssub.s32 %s18, 2
      %s31 = sadd.s32 1, %s26
      %p32 = scmp.ge.s32.totalorder %s31, 1
      %s33 = scalar_select %p32, 0, %s31
      %s34 = sadd.s32 1, %s25
      %s35 = scalar_select %p32, %s34, %s25
      %p36 = scmp.ge.s32.totalorder %s35, 2
      %s37 = scalar_select %p36, 0, %s35
      %s38 = ssub.s32 %s25, %s37
      %s39 = ssub.s32 %s26, %s33
      %s40 = sor.u32 %s38, %s39
      %p41 = scmp.eq.s32.totalorder %s40, 0
      %s43 = sadd.s32 %s42, 1
      %s44 = scalar_select %p41, %s42, %s43
      %p47 = pneg %p41
      %p48 = scmp.eq.s32.totalorder %s18, 1
      %p49 = por %p47, %p48
      %p50 = scmp.ne.s32.totalorder %s42, %s45
      %p51 = scmp.eq.s32.totalorder %s18, 0
      %p52 = por %p50, %p51
      %p53 = scmp.ne.s32.totalorder %s42, %s45
      %p54 = scmp.eq.s32.totalorder %s23, 1
      %p55 = por %p53, %p54
      %p56 = scmp.ne.s32.totalorder %s45, %s46
      %p57 = scmp.eq.s32.totalorder %s23, 0
      %p58 = por %p56, %p57
      %p59 = scmp.ne.s32.totalorder %s45, %s46
      %p60 = scmp.eq.s32.totalorder %s24, 1
      %p61 = por %p59, %p60
      %p63 = scmp.ne.s32.totalorder %s46, %s62
      %p64 = scmp.eq.s32.totalorder %s24, 0
      %p65 = por %p63, %p64
      %s66 = ssub.s32 %s25, %s37
      %s67 = ssub.s32 %s26, %s33
      %s68 = sor.u32 %s66, %s67
      %p69 = scmp.eq.s32.totalorder %s68, 0
      %s71 = sadd.s32 %s70, 1
      %s72 = scalar_select %p69, %s70, %s71
      %p75 = pneg %p69
      %p76 = scmp.eq.s32.totalorder %s18, 1
      %p77 = por %p75, %p76
      %p78 = scmp.ne.s32.totalorder %s70, %s73
      %p79 = scmp.eq.s32.totalorder %s18, 0
      %p80 = por %p78, %p79
      %p81 = scmp.ne.s32.totalorder %s70, %s73
      %p82 = scmp.eq.s32.totalorder %s23, 1
      %p83 = por %p81, %p82
      %p84 = scmp.ne.s32.totalorder %s73, %s74
      %p85 = scmp.eq.s32.totalorder %s23, 0
      %p86 = por %p84, %p85
      %p87 = scmp.ne.s32.totalorder %s73, %s74
      %p88 = scmp.eq.s32.totalorder %s24, 1
      %p89 = por %p87, %p88
      %p91 = scmp.ne.s32.totalorder %s74, %s90
      %p92 = scmp.eq.s32.totalorder %s24, 0
      %p93 = por %p91, %p92
      %s94 = ssub.s32 %s25, %s37
      %s95 = ssub.s32 %s26, %s33
      %s96 = sor.u32 %s94, %s95
      %p97 = scmp.eq.s32.totalorder %s96, 0
      %s99 = sadd.s32 %s98, 1
      %s100 = scalar_select %p97, %s98, %s99
      %p103 = pneg %p97
      %p104 = scmp.eq.s32.totalorder %s18, 1
      %p105 = por %p103, %p104
      %p106 = scmp.ne.s32.totalorder %s98, %s101
      %p107 = scmp.eq.s32.totalorder %s18, 0
      %p108 = por %p106, %p107
      %p109 = scmp.ne.s32.totalorder %s98, %s101
      %p110 = scmp.eq.s32.totalorder %s23, 1
      %p111 = por %p109, %p110
      %p112 = scmp.ne.s32.totalorder %s101, %s102
      %p113 = scmp.eq.s32.totalorder %s23, 0
      %p114 = por %p112, %p113
      %p115 = scmp.ne.s32.totalorder %s101, %s102
      %p116 = scmp.eq.s32.totalorder %s24, 1
      %p117 = por %p115, %p116
      %p119 = scmp.ne.s32.totalorder %s102, %s118
      %p120 = scmp.eq.s32.totalorder %s24, 0
      %p121 = por %p119, %p120
      %s122 = ssub.s32 %s25, %s37
      %p123 = scmp.eq.s32.totalorder %s122, 0
      %s125 = sadd.s32 %s124, 1
      %s126 = scalar_select %p123, %s124, %s125
      %p129 = pneg %p123
      %p130 = scmp.eq.s32.totalorder %s18, 1
      %p131 = por %p129, %p130
      %p132 = scmp.ne.s32.totalorder %s124, %s127
      %p133 = scmp.eq.s32.totalorder %s18, 0
      %p134 = por %p132, %p133
      %p135 = scmp.ne.s32.totalorder %s124, %s127
      %p136 = scmp.eq.s32.totalorder %s23, 1
      %p137 = por %p135, %p136
      %p138 = scmp.ne.s32.totalorder %s127, %s128
      %p139 = scmp.eq.s32.totalorder %s23, 0
      %p140 = por %p138, %p139
      %p141 = scmp.ne.s32.totalorder %s127, %s128
      %p142 = scmp.eq.s32.totalorder %s24, 1
      %p143 = por %p141, %p142
      %p145 = scmp.ne.s32.totalorder %s128, %s144
      %p146 = scmp.eq.s32.totalorder %s24, 0
      %p147 = por %p145, %p146
      %p148 = scmp.le.s32.totalorder 1, %s18
      %p149 = scmp.lt.s32.totalorder %s18, 3
      %p150 = pnand %p148, %p149
      %p151 = pneg %p150
      // Predicated region
      $region9: #{tpu_custom_call.1} parent=5 // pred_check
        _
      $region10: #{tpu_custom_call.1} parent=5 // pred_check_branch
        %153 = sbr.rel (%p150) target = $region12
      $region11: #{tpu_custom_call.1} parent=5 // pred_region
        %s154 = ssub.s32 %s18, 1
      $region12: #{tpu_custom_call.1} parent=5 // pred_fallthru
        _
      %p155 = scmp.lt.s32.totalorder %s18, 2
      // Predicated region
      $region13: #{tpu_custom_call.1} parent=5 // pred_check
        %p156 = pneg %p155
      $region14: #{tpu_custom_call.1} parent=5 // pred_check_branch
        %158 = sbr.rel (%p156) target = $region16
      $region15: #{tpu_custom_call.1} parent=5 // pred_region
        // Predicated region
        $region17: #{tpu_custom_call.1} parent=15 // pred_check
          %p159 = pneg %p52
        $region18: #{tpu_custom_call.1} parent=15 // pred_check_branch
          %161 = sbr.rel (%p159) target = $region20
        $region19: #{tpu_custom_call.1} parent=15 // pred_region
          %s162 = sand.u32 %s42, 1
          %s163 = scalar_lea.sflag [#allocation3], %s162
          %s164 = sand.u32 %s42, 1
          %s165 = smul.addr %s164, 8
          %s166 = scalar_lea.vmem [#allocation2], %s165
          %s168 = ssub.s32 128, 128
          %169 = vsyncadd %s163, %s168
          %s170 = sadd.s32 %s26, %s25
          %s171 = smul.addr %s170, 128
          %s172 = scalar_lea.hbm %s0, %s171
          %s174 = sshll.u32 %s166, 4
          %s175 = int_to_ptr.vmem [resolvable:$true] %s174
          %177 = dma.hbm_to_vmem [thread:$0]  %s172, 128, %s175, %s163
        $region20: #{tpu_custom_call.1} parent=15 // pred_fallthru
          _
        // Predicated region
        $region21: #{tpu_custom_call.1} parent=15 // pred_check
          %p178 = pneg %p80
        $region22: #{tpu_custom_call.1} parent=15 // pred_check_branch
          %180 = sbr.rel (%p178) target = $region24
        $region23: #{tpu_custom_call.1} parent=15 // pred_region
          %s181 = sand.u32 %s18, 1
          %s182 = scalar_lea.sflag [#allocation6], %s181
          %s183 = sand.u32 %s70, 1
          %s184 = smul.addr %s183, 16
          %s185 = scalar_lea.vmem [#allocation5], %s184
          %s187 = ssub.s32 256, 256
          %188 = vsyncadd %s182, %s187
          %s189 = smul.addr %s25, 2
          %s190 = sadd.s32 %s26, %s189
          %s191 = smul.addr %s190, 128
          %s192 = scalar_lea.hbm %s1, %s191
          %s193 = sshll.u32 %s185, 4
          %s194 = int_to_ptr.vmem [resolvable:$true] %s193
          %199 = dma.hbm_to_vmem [thread:$0]  %s192, 256, %s194, %s182, 128, 128, 8
        $region24: #{tpu_custom_call.1} parent=15 // pred_fallthru
          _
        // Predicated region
        $region25: #{tpu_custom_call.1} parent=15 // pred_check
          %p200 = pneg %p108
        $region26: #{tpu_custom_call.1} parent=15 // pred_check_branch
          %202 = sbr.rel (%p200) target = $region28
        $region27: #{tpu_custom_call.1} parent=15 // pred_region
          %s203 = sand.u32 %s18, 1
          %s204 = scalar_lea.sflag [#allocation6], %s203
          %s205 = sand.u32 %s98, 1
          %s206 = smul.addr %s205, 8
          %s207 = scalar_lea.vmem [#allocation7], %s206
          %s209 = ssub.s32 128, 128
          %210 = vsyncadd %s204, %s209
          %s211 = sadd.s32 %s26, %s25
          %s212 = smul.addr %s211, 128
          %s213 = scalar_lea.hbm %s2, %s212
          %s215 = sshll.u32 %s207, 4
          %s216 = int_to_ptr.vmem [resolvable:$true] %s215
          %218 = dma.hbm_to_vmem [thread:$0]  %s213, 128, %s216, %s204
        $region28: #{tpu_custom_call.1} parent=15 // pred_fallthru
          _
      $region16: #{tpu_custom_call.1} parent=5 // pred_fallthru
        _
      %p219 = scmp.le.s32.totalorder 1, %s18
      %p220 = scmp.lt.s32.totalorder %s18, 3
      %p221 = pnand %p219, %p220
      %p222 = pneg %p221
      // Predicated region
      $region29: #{tpu_custom_call.1} parent=5 // pred_check
        _
      $region30: #{tpu_custom_call.1} parent=5 // pred_check_branch
        %224 = sbr.rel (%p221) target = $region32
      $region31: #{tpu_custom_call.1} parent=5 // pred_region
        %s225 = ssub.s32 %s18, 1
        %s226 = sand.u32 %s45, 1
        %s227 = scalar_lea.sflag [#allocation3], %s226
        %s228 = sand.u32 %s45, 1
        %s229 = smul.addr %s228, 8
        %s230 = scalar_lea.vmem [#allocation2], %s229
        // Predicated region
        $region33: #{tpu_custom_call.1} parent=31 // pred_check
          %p231 = pneg %p58
        $region34: #{tpu_custom_call.1} parent=31 // pred_check_branch
          %233 = sbr.rel (%p231) target = $region36
        $region35: #{tpu_custom_call.1} parent=31 // pred_region
          %234 = dma.done %s227, 128
        $region36: #{tpu_custom_call.1} parent=31 // pred_fallthru
          _
        %s235 = sand.u32 %s23, 1
        %s236 = scalar_lea.sflag [#allocation6], %s235
        %s237 = sand.u32 %s73, 1
        %s238 = smul.addr %s237, 16
        %s239 = scalar_lea.vmem [#allocation5], %s238
        // Predicated region
        $region37: #{tpu_custom_call.1} parent=31 // pred_check
          %p240 = pneg %p86
        $region38: #{tpu_custom_call.1} parent=31 // pred_check_branch
          %242 = sbr.rel (%p240) target = $region40
        $region39: #{tpu_custom_call.1} parent=31 // pred_region
          %243 = dma.done %s236, 256
        $region40: #{tpu_custom_call.1} parent=31 // pred_fallthru
          _
        %s244 = sand.u32 %s23, 1
        %s245 = scalar_lea.sflag [#allocation6], %s244
        %s246 = sand.u32 %s101, 1
        %s247 = smul.addr %s246, 8
        %s248 = scalar_lea.vmem [#allocation7], %s247
        // Predicated region
        $region41: #{tpu_custom_call.1} parent=31 // pred_check
          %p249 = pneg %p114
        $region42: #{tpu_custom_call.1} parent=31 // pred_check_branch
          %251 = sbr.rel (%p249) target = $region44
        $region43: #{tpu_custom_call.1} parent=31 // pred_region
          %252 = dma.done %s245, 128
        $region44: #{tpu_custom_call.1} parent=31 // pred_fallthru
          _
        %s253 = sand.u32 %s45, 1
        %s254 = scalar_lea.sflag [#allocation3], %s253
        %s255 = sand.u32 %s45, 1
        %s256 = smul.addr %s255, 8
        %s257 = scalar_lea.vmem [#allocation2], %s256
        %p258 = pneg %p58
        %p259 = pneg %p55
        %s260 = sand.u32 %s23, 1
        %s261 = scalar_lea.sflag [#allocation6], %s260
        %s262 = sand.u32 %s73, 1
        %s263 = smul.addr %s262, 16
        %s264 = scalar_lea.vmem [#allocation5], %s263
        %p265 = pneg %p86
        %p266 = pneg %p83
        %s267 = sand.u32 %s23, 1
        %s268 = scalar_lea.sflag [#allocation6], %s267
        %s269 = sand.u32 %s101, 1
        %s270 = smul.addr %s269, 8
        %s271 = scalar_lea.vmem [#allocation7], %s270
        %p272 = pneg %p114
        %p273 = pneg %p111
        %p274 = pneg %p140
        %p275 = pneg %p137
        %s276 = sand.u32 %s127, 1
        %s277 = scalar_lea.sflag [#allocation4], %s276
        %s278 = sand.u32 %s127, 1
        %s279 = smul.addr %s278, 24
        %s280 = scalar_lea.vmem [#allocation8], %s279
        %v281 = vld [vmem:[%s230] sm:$0xff]
        %v282 = vld [vmem:[%s239] sm:$0xff]
        %s283 = scalar_lea.vmem %s239, 8 [#allocation5]
        %v284 = vld [vmem:[%s283] sm:$0xff]
        %v285 = vld [vmem:[%s248] sm:$0xff]
        %v286 = vsub.f32 %v284, %v282
        %v287 = vmax.f32 %v286, 0.0
        %v288 = vsub.f32 0.0, %v286
        %v289 = vmax.f32 %v288, 0.0
        %vm290 = vcmp.eq.f32.partialorder %v281, 1.0
        %vm291 = vcmp.eq.f32.partialorder %v281, 0.0
        %v292 = vsel %vm290, %v287, 0.0
        %v293 = vmul.f32 %v292, 0.1
        %v294 = vadd.f32 %v293, 0.9
        %v295 = vmin.f32 %v292, %v294
        %v296 = vmul.f32 %v287, %v285
        %v297 = vsel %vm291, %v296, 0.0
        %v298 = vsel %vm290, %v289, 0.0
        %p299 = scmp.eq.s32.totalorder %s28, 0
        // Predicated region
        $region45: #{tpu_custom_call.1} parent=31 // pred_check
          %p300 = pneg %p299
        $region46: #{tpu_custom_call.1} parent=31 // pred_check_branch
          %302 = sbr.rel (%p300) target = $region48
        $region47: #{tpu_custom_call.1} parent=31 // pred_region
          %303 = vst [vmem:[%s280] sm:$0xff] 0.0
          %304 = vst [vmem:[%s280 + $0x8] sm:$0xff] 0.0
          %305 = vst [vmem:[%s280 + $0x10] sm:$0xff] 0.0
        $region48: #{tpu_custom_call.1} parent=31 // pred_fallthru
          _
        %v306 = vld [vmem:[%s280] sm:$0xff]
        %v307 = vadd.f32 %v295, 0.0
        %v308 = vadd.f32 %v306, %v307
        %309 = vst [vmem:[%s280] sm:$0xff] %v308
        %s310 = scalar_lea.vmem %s280, 8 [#allocation8]
        %v311 = vld [vmem:[%s310] sm:$0xff]
        %v312 = vadd.f32 %v297, 0.0
        %v313 = vadd.f32 %v311, %v312
        %314 = vst [vmem:[%s310] sm:$0xff] %v313
        %s315 = scalar_lea.vmem %s280, 16 [#allocation8]
        %v316 = vld [vmem:[%s315] sm:$0xff]
        %v317 = vadd.f32 %v298, 0.0
        %v318 = vadd.f32 %v316, %v317
        %319 = vst [vmem:[%s315] sm:$0xff] %v318
        %s320 = sand.u32 %s127, 1
        %s321 = scalar_lea.sflag [#allocation4], %s320
        %s322 = sand.u32 %s127, 1
        %s323 = smul.addr %s322, 24
        %s324 = scalar_lea.vmem [#allocation8], %s323
        // Predicated region
        $region49: #{tpu_custom_call.1} parent=31 // pred_check
          %p325 = pneg %p137
        $region50: #{tpu_custom_call.1} parent=31 // pred_check_branch
          %327 = sbr.rel (%p325) target = $region52
        $region51: #{tpu_custom_call.1} parent=31 // pred_region
          %s329 = ssub.s32 384, 384
          %330 = vsyncadd %s321, %s329
          %s331 = smul.addr %s27, 3
          %s332 = smul.addr %s331, 128
          %s333 = scalar_lea.hbm %s3, %s332
          %s334 = sshll.u32 %s324, 4
          %s335 = int_to_ptr.vmem [resolvable:$true] %s334
          %340 = dma.vmem_to_hbm [thread:$0]  %s335, 384, %s333, %s321, 128, 128, 8
        $region52: #{tpu_custom_call.1} parent=31 // pred_fallthru
          _
      $region32: #{tpu_custom_call.1} parent=5 // pred_fallthru
        _
      %p341 = scmp.le.s32.totalorder 2, %s18
      // Predicated region
      $region53: #{tpu_custom_call.1} parent=5 // pred_check
        %p342 = pneg %p341
      $region54: #{tpu_custom_call.1} parent=5 // pred_check_branch
        %344 = sbr.rel (%p342) target = $region56
      $region55: #{tpu_custom_call.1} parent=5 // pred_region
        %s345 = ssub.s32 %s18, 2
        // Predicated region
        $region57: #{tpu_custom_call.1} parent=55 // pred_check
          %p346 = pneg %p143
        $region58: #{tpu_custom_call.1} parent=55 // pred_check_branch
          %348 = sbr.rel (%p346) target = $region60
        $region59: #{tpu_custom_call.1} parent=55 // pred_region
          %s349 = sand.u32 %s128, 1
          %s350 = scalar_lea.sflag [#allocation4], %s349
          %s351 = sand.u32 %s128, 1
          %s352 = smul.addr %s351, 24
          %s353 = scalar_lea.vmem [#allocation8], %s352
          %354 = dma.done %s350, 384
        $region60: #{tpu_custom_call.1} parent=55 // pred_fallthru
          _
      $region56: #{tpu_custom_call.1} parent=5 // pred_fallthru
        _
    $region6: #{tpu_custom_call.1} parent=1 // loop_footer
      %s22 = sadd.s32 1, %s18
    $region7: #{tpu_custom_call.1} parent=1 // loop_footer_branch
      %17 = sbr.rel target = $region3
    $region8: #{tpu_custom_call.1} parent=1 // loop_exit
      _
    %355 = vsyncpa [#allocation3], 1
    %s356 = scalar_lea.sflag [#allocation3], 1
    %357 = vsyncpa %s356, 1
    %358 = vsyncpa [#allocation6], 1
    %s359 = scalar_lea.sflag [#allocation6], 1
    %360 = vsyncpa %s359, 1
    %361 = vsyncpa [#allocation4], 1
    %s362 = scalar_lea.sflag [#allocation4], 1
    %363 = vsyncpa %s362, 1

</llo_original>
